<compile_context>
chip_gen: v5e
topology: v5e:2x2
jax: 0.10.0
libtpu: 0.0.40
codegen_flags: <defaults>
</compile_context>

<pallas_src>
import jax
import jax.numpy as jnp
from jax.experimental import pallas as pl
from jax.experimental.pallas import tpu as pltpu

_LANE = 128        # lane width: padded feature dims
_SUBLANE = 16      # bf16 sublane packing: batch tile rounded to this
_TILE_CAP = 1024   # max batch-tile rows per grid step


def _round_up(n, m):
    return (n + m - 1) // m * m


def _sigmoid(y):
    # Single EUP transcendental (tanh); exact [0, 1] range, no overflow path.
    return 0.5 * (1.0 + jnp.tanh(0.5 * y))


def _make_fused_mlp_kernel(num_layers):
    """Kernel over refs: (x, w_0, b_0, ..., w_{L-1}, b_{L-1}, out)."""

    def kernel(*refs):
        x_ref = refs[0]
        o_ref = refs[-1]
        h = x_ref[...]                                   # (tile_b, Din) bf16
        for l in range(num_layers):
            w_ref = refs[1 + 2 * l]
            b_ref = refs[2 + 2 * l]
            # bf16 x bf16 MXU matmul, f32 accumulation.
            y = jnp.dot(h, w_ref[...], preferred_element_type=jnp.float32)
            y = y + b_ref[...]                           # (1, dout_pad) broadcast
            if l == num_layers - 1:
                # Only output column 0 is real: 1-lane sigmoid + masked store.
                o_ref[...] = _sigmoid(y[:, :1]).astype(o_ref.dtype)
            else:
                # f32 elementwise sigmoid, cast back to bf16 for the next dot.
                # Padded lanes hold sigmoid(0)=0.5 but hit zero weight rows.
                h = _sigmoid(y).astype(jnp.bfloat16)

    return kernel


def init_neural_net_params(key, input_size, hidden_layers):
    """PyTorch nn.Linear-style init (U(-k, k), k = 1/sqrt(fan_in)).

    Weights are stored transposed as (in, out): the first layer keeps its real
    `input_size` rows (x is fed unpadded); later layers zero-pad rows to 128 so
    padded activation lanes are inert.  All output dims are zero-padded to 128
    lanes.  Weights are bf16, biases f32.  Returns (params, logical_sizes).
    """
    sizes = [input_size] + list(hidden_layers) + [1]
    params = []
    for i in range(len(sizes) - 1):
        din, dout = sizes[i], sizes[i + 1]
        din_p = din if i == 0 else _round_up(din, _LANE)
        dout_p = _round_up(dout, _LANE)
        key, kw, kb = jax.random.split(key, 3)
        bound = 1.0 / float(din) ** 0.5
        w = jax.random.uniform(kw, (din, dout), jnp.float32, -bound, bound)
        b = jax.random.uniform(kb, (1, dout), jnp.float32, -bound, bound)
        w = jnp.pad(w, ((0, din_p - din), (0, dout_p - dout)))
        b = jnp.pad(b, ((0, 0), (0, dout_p - dout)))
        params.append((w.astype(jnp.bfloat16), b))
        del din_p, dout_p
    return params, sizes


@jax.jit
def neural_net_forward(x, params):
    """Fused forward pass of NeuralNet as a single Pallas call. Returns (B, 1)."""
    B, Din = x.shape
    num_layers = len(params)

    # Batch tiling: cap at 1024 rows; aim for >= 2 grid steps (v7x megacore)
    # when the batch allows, rounded to bf16 sublane packing (16).
    tile_b = min(_TILE_CAP, _round_up(pl.cdiv(B, 2), _SUBLANE))
    grid = (pl.cdiv(B, tile_b),)

    x_bf16 = x.astype(jnp.bfloat16)

    in_specs = [pl.BlockSpec((tile_b, Din), lambda i: (i, 0))]
    flat_inputs = [x_bf16]
    for (w, b) in params:
        dp_in, dp_out = w.shape
        in_specs.append(pl.BlockSpec((dp_in, dp_out), lambda i: (0, 0)))
        in_specs.append(pl.BlockSpec((1, dp_out), lambda i: (0, 0)))
        flat_inputs += [w, b]

    out = pl.pallas_call(
        _make_fused_mlp_kernel(num_layers),
        out_shape=jax.ShapeDtypeStruct((B, 1), jnp.float32),
        grid=grid,
        in_specs=in_specs,
        out_specs=pl.BlockSpec((tile_b, 1), lambda i: (i, 0)),
        compiler_params=pltpu.CompilerParams(
            dimension_semantics=("parallel",)),   # batch shards across TCs
    )(*flat_inputs)
    return out


if __name__ == "__main__":
    batch = 8
    input_size = 32
    hidden_layers = (32, 16)

    key = jax.random.PRNGKey(0)
    kx, kp = jax.random.split(key)
    x = jax.random.normal(kx, (batch, input_size), dtype=jnp.float32)
    params, sizes = init_neural_net_params(kp, input_size, hidden_layers)

    out = neural_net_forward(x, params)
    jax.block_until_ready(out)

    # Sanity: shape, sigmoid range, agreement with a pure-JAX f32 reference
    # (tolerance covers the bf16 input/weight quantization in the kernel).
    assert out.shape == (batch, 1)
    ref = x
    for (w, b), din, dout in zip(params, sizes[:-1], sizes[1:]):
        ref = jax.nn.sigmoid(ref @ w[:din, :dout].astype(jnp.float32) + b[:, :dout])
    assert jnp.allclose(out, ref, atol=2e-2, rtol=2e-2)
    assert bool(jnp.all((out >= 0.0) & (out <= 1.0)))

    print("KERNEL_OK")
</pallas_src>

<mosaic_0001>
module attributes {stable_mosaic.version = 11 : i64} {
  func.func @kernel(%arg0: i32, %arg1: memref<16x32xbf16, #tpu.memory_space<vmem>>, %arg2: memref<32x128xbf16, #tpu.memory_space<vmem>>, %arg3: memref<1x128xf32, #tpu.memory_space<vmem>>, %arg4: memref<128x128xbf16, #tpu.memory_space<vmem>>, %arg5: memref<1x128xf32, #tpu.memory_space<vmem>>, %arg6: memref<128x128xbf16, #tpu.memory_space<vmem>>, %arg7: memref<1x128xf32, #tpu.memory_space<vmem>>, %arg8: memref<16x1xf32, #tpu.memory_space<vmem>>) attributes {dimension_semantics = [#tpu.dimension_semantics<parallel>], iteration_bounds = array<i64: 1>, scalar_prefetch = 0 : i64, scratch_operands = 0 : i64, tpu.core_type = #tpu.core_type<tc>, window_params = [{transform_indices = @transform_0, window_bounds = array<i64: 16, 32>}, {pipeline_mode = #tpu.pipeline_mode<synchronous>, transform_indices = @transform_1, window_bounds = array<i64: 32, 128>}, {pipeline_mode = #tpu.pipeline_mode<synchronous>, transform_indices = @transform_2, window_bounds = array<i64: 1, 128>}, {pipeline_mode = #tpu.pipeline_mode<synchronous>, transform_indices = @transform_3, window_bounds = array<i64: 128, 128>}, {pipeline_mode = #tpu.pipeline_mode<synchronous>, transform_indices = @transform_4, window_bounds = array<i64: 1, 128>}, {pipeline_mode = #tpu.pipeline_mode<synchronous>, transform_indices = @transform_5, window_bounds = array<i64: 128, 128>}, {pipeline_mode = #tpu.pipeline_mode<synchronous>, transform_indices = @transform_6, window_bounds = array<i64: 1, 128>}, {transform_indices = @transform_7, window_bounds = array<i64: 16, 1>}]} {
    %c0 = arith.constant 0 : index
    %c0_0 = arith.constant 0 : index
    %0 = vector.load %arg1[%c0, %c0_0] : memref<16x32xbf16, #tpu.memory_space<vmem>>, vector<16x32xbf16>
    %c0_1 = arith.constant 0 : index
    %c0_2 = arith.constant 0 : index
    %1 = vector.load %arg2[%c0_1, %c0_2] : memref<32x128xbf16, #tpu.memory_space<vmem>>, vector<32x128xbf16>
    %cst = arith.constant dense<0.000000e+00> : vector<16x128xf32>
    %2 = tpu.matmul %0, %1, %cst {dimension_numbers = #tpu.dot_dimension_numbers<[1], [0], [0], [1], [0, 0, 1, 1], [], []>} : vector<16x32xbf16>, vector<32x128xbf16>, vector<16x128xf32> -> vector<16x128xf32>
    %c0_3 = arith.constant 0 : index
    %c0_4 = arith.constant 0 : index
    %3 = vector.load %arg3[%c0_3, %c0_4] : memref<1x128xf32, #tpu.memory_space<vmem>>, vector<1x128xf32>
    %4 = vector.broadcast %3 : vector<1x128xf32> to vector<16x128xf32>
    %5 = arith.addf %2, %4 : vector<16x128xf32>
    %cst_5 = arith.constant 5.000000e-01 : f32
    %6 = vector.broadcast %cst_5 : f32 to vector<16x128xf32>
    %7 = arith.mulf %6, %5 : vector<16x128xf32>
    %8 = math.tanh %7 : vector<16x128xf32>
    %cst_6 = arith.constant 1.000000e+00 : f32
    %9 = vector.broadcast %cst_6 : f32 to vector<16x128xf32>
    %10 = arith.addf %9, %8 : vector<16x128xf32>
    %cst_7 = arith.constant 5.000000e-01 : f32
    %11 = vector.broadcast %cst_7 : f32 to vector<16x128xf32>
    %12 = arith.mulf %11, %10 : vector<16x128xf32>
    %13 = arith.truncf %12 : vector<16x128xf32> to vector<16x128xbf16>
    %c0_8 = arith.constant 0 : index
    %c0_9 = arith.constant 0 : index
    %14 = vector.load %arg4[%c0_8, %c0_9] : memref<128x128xbf16, #tpu.memory_space<vmem>>, vector<128x128xbf16>
    %cst_10 = arith.constant dense<0.000000e+00> : vector<16x128xf32>
    %15 = tpu.matmul %13, %14, %cst_10 {dimension_numbers = #tpu.dot_dimension_numbers<[1], [0], [0], [1], [0, 0, 1, 1], [], []>} : vector<16x128xbf16>, vector<128x128xbf16>, vector<16x128xf32> -> vector<16x128xf32>
    %c0_11 = arith.constant 0 : index
    %c0_12 = arith.constant 0 : index
    %16 = vector.load %arg5[%c0_11, %c0_12] : memref<1x128xf32, #tpu.memory_space<vmem>>, vector<1x128xf32>
    %17 = vector.broadcast %16 : vector<1x128xf32> to vector<16x128xf32>
    %18 = arith.addf %15, %17 : vector<16x128xf32>
    %cst_13 = arith.constant 5.000000e-01 : f32
    %19 = vector.broadcast %cst_13 : f32 to vector<16x128xf32>
    %20 = arith.mulf %19, %18 : vector<16x128xf32>
    %21 = math.tanh %20 : vector<16x128xf32>
    %cst_14 = arith.constant 1.000000e+00 : f32
    %22 = vector.broadcast %cst_14 : f32 to vector<16x128xf32>
    %23 = arith.addf %22, %21 : vector<16x128xf32>
    %cst_15 = arith.constant 5.000000e-01 : f32
    %24 = vector.broadcast %cst_15 : f32 to vector<16x128xf32>
    %25 = arith.mulf %24, %23 : vector<16x128xf32>
    %26 = arith.truncf %25 : vector<16x128xf32> to vector<16x128xbf16>
    %c0_16 = arith.constant 0 : index
    %c0_17 = arith.constant 0 : index
    %27 = vector.load %arg6[%c0_16, %c0_17] : memref<128x128xbf16, #tpu.memory_space<vmem>>, vector<128x128xbf16>
    %cst_18 = arith.constant dense<0.000000e+00> : vector<16x128xf32>
    %28 = tpu.matmul %26, %27, %cst_18 {dimension_numbers = #tpu.dot_dimension_numbers<[1], [0], [0], [1], [0, 0, 1, 1], [], []>} : vector<16x128xbf16>, vector<128x128xbf16>, vector<16x128xf32> -> vector<16x128xf32>
    %c0_19 = arith.constant 0 : index
    %c0_20 = arith.constant 0 : index
    %29 = vector.load %arg7[%c0_19, %c0_20] : memref<1x128xf32, #tpu.memory_space<vmem>>, vector<1x128xf32>
    %30 = vector.broadcast %29 : vector<1x128xf32> to vector<16x128xf32>
    %31 = arith.addf %28, %30 : vector<16x128xf32>
    %32 = vector.extract_strided_slice %31 {offsets = [0, 0], sizes = [16, 1], strides = [1, 1]} : vector<16x128xf32> to vector<16x1xf32>
    %cst_21 = arith.constant 5.000000e-01 : f32
    %33 = vector.broadcast %cst_21 : f32 to vector<16x1xf32>
    %34 = arith.mulf %33, %32 : vector<16x1xf32>
    %35 = math.tanh %34 : vector<16x1xf32>
    %cst_22 = arith.constant 1.000000e+00 : f32
    %36 = vector.broadcast %cst_22 : f32 to vector<16x1xf32>
    %37 = arith.addf %36, %35 : vector<16x1xf32>
    %cst_23 = arith.constant 5.000000e-01 : f32
    %38 = vector.broadcast %cst_23 : f32 to vector<16x1xf32>
    %39 = arith.mulf %38, %37 : vector<16x1xf32>
    %c0_24 = arith.constant 0 : index
    %c0_25 = arith.constant 0 : index
    %40 = vector.load %arg8[%c0_24, %c0_25] : memref<16x1xf32, #tpu.memory_space<vmem>>, vector<16x1xf32>
    tpu.vector_store %arg8[%c0_24, %c0_25], %39 {strides = array<i32>} : memref<16x1xf32, #tpu.memory_space<vmem>>, vector<16x1xf32>,
    return
  }
  func.func @transform_0(%arg0: i32) -> (i32, i32) {
    %c0_i32 = arith.constant 0 : i32
    %c0_i32_0 = arith.constant 0 : i32
    return %arg0, %c0_i32 : i32, i32
  }
  func.func @transform_1(%arg0: i32) -> (i32, i32) {
    %c0_i32 = arith.constant 0 : i32
    %c0_i32_0 = arith.constant 0 : i32
    %c0_i32_1 = arith.constant 0 : i32
    return %c0_i32, %c0_i32_0 : i32, i32
  }
  func.func @transform_2(%arg0: i32) -> (i32, i32) {
    %c0_i32 = arith.constant 0 : i32
    %c0_i32_0 = arith.constant 0 : i32
    %c0_i32_1 = arith.constant 0 : i32
    return %c0_i32, %c0_i32_0 : i32, i32
  }
  func.func @transform_3(%arg0: i32) -> (i32, i32) {
    %c0_i32 = arith.constant 0 : i32
    %c0_i32_0 = arith.constant 0 : i32
    %c0_i32_1 = arith.constant 0 : i32
    return %c0_i32, %c0_i32_0 : i32, i32
  }
  func.func @transform_4(%arg0: i32) -> (i32, i32) {
    %c0_i32 = arith.constant 0 : i32
    %c0_i32_0 = arith.constant 0 : i32
    %c0_i32_1 = arith.constant 0 : i32
    return %c0_i32, %c0_i32_0 : i32, i32
  }
  func.func @transform_5(%arg0: i32) -> (i32, i32) {
    %c0_i32 = arith.constant 0 : i32
    %c0_i32_0 = arith.constant 0 : i32
    %c0_i32_1 = arith.constant 0 : i32
    return %c0_i32, %c0_i32_0 : i32, i32
  }
  func.func @transform_6(%arg0: i32) -> (i32, i32) {
    %c0_i32 = arith.constant 0 : i32
    %c0_i32_0 = arith.constant 0 : i32
    %c0_i32_1 = arith.constant 0 : i32
    return %c0_i32, %c0_i32_0 : i32, i32
  }
  func.func @transform_7(%arg0: i32) -> (i32, i32) {
    %c0_i32 = arith.constant 0 : i32
    %c0_i32_0 = arith.constant 0 : i32
    return %arg0, %c0_i32 : i32, i32
  }
}

</mosaic_0001>

<llo_original>
// kernel: neural_net_forward.1
$region0: #{neural_net_forward.1}
  #allocation0 [shape = 'u32[]', space=smem, size = 0x4, offset = 0x4, fixed_abs, tag = 'smem constant byte address 0x4 - core index']
  #allocation1 [shape = 'u32[72,128]{1,0:T(1,128)}', space=vmem, size = 0x9000, scoped, tag = 'internal scratch']
  %s0 = inlined_call_operand.vmem [shape: bf16[8,32], index: 0, kind: input, shape index: {}]
  %s1 = inlined_call_operand.hbm [shape: bf16[32,128], index: 1, kind: input, shape index: {}]
  %s2 = inlined_call_operand.vmem [shape: f32[1,128], index: 2, kind: input, shape index: {}]
  %s3 = inlined_call_operand.hbm [shape: bf16[128,128], index: 3, kind: input, shape index: {}]
  %s4 = inlined_call_operand.vmem [shape: f32[1,128], index: 4, kind: input, shape index: {}]
  %s5 = inlined_call_operand.hbm [shape: bf16[128,128], index: 5, kind: input, shape index: {}]
  %s6 = inlined_call_operand.vmem [shape: f32[1,128], index: 6, kind: input, shape index: {}]
  %s7 = inlined_call_operand.vmem [shape: f32[8,1], index: 7, kind: output, shape index: {}]
  %s8 = sld [smem:[#allocation0]]
  $region84: #{neural_net_forward.1} parent=0
    _
  %s10 = ssub.s32 1, %s8
  %s11 = scalar_select 0, %s10, %s8
  $region1: #{neural_net_forward.1} parent=0
    #allocation2 [shape = 'u8[8192]{0}', space=vmem, size = 0x2000, scoped, tag = 'input window, operand 1, single buffered']
    #allocation3 [shape = 's32[1]{0}', space=sflag, size = 0x4, scoped, tag = 'scoped memory for neural_net_forward.1']
    #allocation4 [shape = 'u8[32768]{0}', space=vmem, size = 0x8000, scoped, tag = 'input window, operand 3, single buffered']
    #allocation5 [shape = 's32[1]{0}', space=sflag, size = 0x4, scoped, tag = 'scoped memory for neural_net_forward.1']
    #allocation6 [shape = 'u8[32768]{0}', space=vmem, size = 0x8000, scoped, tag = 'input window, operand 5, single buffered']
    #allocation7 [shape = 'u8[8192]{0}', space=vmem, size = 0x2000, scoped, tag = 'output window, operand 0, single buffered']
    %12 = vsyncpa [#allocation3], 0
    %13 = vsyncpa [#allocation5], 0
    // Predicated region
    $region2: #{neural_net_forward.1} parent=1 // pred_check
      _
    $region3: #{neural_net_forward.1} parent=1 // pred_check_branch
      %15 = sbr.rel (0) target = $region5
    $region4: #{neural_net_forward.1} parent=1 // pred_region
      _
    $region5: #{neural_net_forward.1} parent=1 // pred_fallthru
      _
    // Predicated region
    $region6: #{neural_net_forward.1} parent=1 // pred_check
      _
    $region7: #{neural_net_forward.1} parent=1 // pred_check_branch
      %17 = sbr.rel (0) target = $region9
    $region8: #{neural_net_forward.1} parent=1 // pred_region
      %19 = vsyncadd [#allocation3], 0
      %s20 = sshll.u32 %s1, 4
      %s21 = int_to_ptr.hbm [resolvable:$true] %s20
      %s22 = sshll.u32 [#allocation2], 4
      %s23 = int_to_ptr.vmem [resolvable:$true] %s22
      %28 = dma.hbm_to_vmem [thread:$0]  %s21, 256, %s23, [#allocation3], 64, 64, 4
    $region9: #{neural_net_forward.1} parent=1 // pred_fallthru
      _
    // Predicated region
    $region10: #{neural_net_forward.1} parent=1 // pred_check
      _
    $region11: #{neural_net_forward.1} parent=1 // pred_check_branch
      %30 = sbr.rel (0) target = $region13
    $region12: #{neural_net_forward.1} parent=1 // pred_region
      _
    $region13: #{neural_net_forward.1} parent=1 // pred_fallthru
      _
    // Predicated region
    $region14: #{neural_net_forward.1} parent=1 // pred_check
      _
    $region15: #{neural_net_forward.1} parent=1 // pred_check_branch
      %32 = sbr.rel (0) target = $region17
    $region16: #{neural_net_forward.1} parent=1 // pred_region
      %34 = vsyncadd [#allocation5], 0
      %s35 = sshll.u32 %s3, 4
      %s36 = int_to_ptr.hbm [resolvable:$true] %s35
      %s37 = sshll.u32 [#allocation4], 4
      %s38 = int_to_ptr.vmem [resolvable:$true] %s37
      %43 = dma.hbm_to_vmem [thread:$0]  %s36, 1024, %s38, [#allocation5], 64, 64, 4
    $region17: #{neural_net_forward.1} parent=1 // pred_fallthru
      _
    // Predicated region
    $region18: #{neural_net_forward.1} parent=1 // pred_check
      _
    $region19: #{neural_net_forward.1} parent=1 // pred_check_branch
      %45 = sbr.rel (0) target = $region21
    $region20: #{neural_net_forward.1} parent=1 // pred_region
      _
    $region21: #{neural_net_forward.1} parent=1 // pred_fallthru
      _
    // Predicated region
    $region22: #{neural_net_forward.1} parent=1 // pred_check
      _
    $region23: #{neural_net_forward.1} parent=1 // pred_check_branch
      %47 = sbr.rel (0) target = $region25
    $region24: #{neural_net_forward.1} parent=1 // pred_region
      %49 = vsyncadd [#allocation5], 0
      %s50 = sshll.u32 %s5, 4
      %s51 = int_to_ptr.hbm [resolvable:$true] %s50
      %s52 = sshll.u32 [#allocation6], 4
      %s53 = int_to_ptr.vmem [resolvable:$true] %s52
      %58 = dma.hbm_to_vmem [thread:$0]  %s51, 1024, %s53, [#allocation5], 64, 64, 4
    $region25: #{neural_net_forward.1} parent=1 // pred_fallthru
      _
    // Predicated region
    $region26: #{neural_net_forward.1} parent=1 // pred_check
      _
    $region27: #{neural_net_forward.1} parent=1 // pred_check_branch
      %60 = sbr.rel (0) target = $region29
    $region28: #{neural_net_forward.1} parent=1 // pred_region
      _
    $region29: #{neural_net_forward.1} parent=1 // pred_fallthru
      _
    // Predicated region
    $region30: #{neural_net_forward.1} parent=1 // pred_check
      _
    $region31: #{neural_net_forward.1} parent=1 // pred_check_branch
      %62 = sbr.rel (0) target = $region33
    $region32: #{neural_net_forward.1} parent=1 // pred_region
      %64 = dma.done [#allocation3], 256
    $region33: #{neural_net_forward.1} parent=1 // pred_fallthru
      _
    // Predicated region
    $region34: #{neural_net_forward.1} parent=1 // pred_check
      _
    $region35: #{neural_net_forward.1} parent=1 // pred_check_branch
      %66 = sbr.rel (0) target = $region37
    $region36: #{neural_net_forward.1} parent=1 // pred_region
      %68 = dma.done [#allocation5], 1024
    $region37: #{neural_net_forward.1} parent=1 // pred_fallthru
      _
    // Predicated region
    $region38: #{neural_net_forward.1} parent=1 // pred_check
      _
    $region39: #{neural_net_forward.1} parent=1 // pred_check_branch
      %70 = sbr.rel (0) target = $region41
    $region40: #{neural_net_forward.1} parent=1 // pred_region
      %72 = dma.done [#allocation5], 1024
    $region41: #{neural_net_forward.1} parent=1 // pred_fallthru
      _
    %v74 = vld [vmem:[%s0] sm:$0xf]
    %v75 = vld [vmem:[%s0 + $0x4] sm:$0xf]
    %v76 = vld [vmem:[#allocation2] sm:$0xf]
    %v77 = vld [vmem:[#allocation2 + $0x4] sm:$0xf]
    %v78 = vld [vmem:[#allocation2 + $0x8] sm:$0xf]
    %v79 = vld [vmem:[#allocation2 + $0xc] sm:$0xf]
    %v80 = vld [vmem:[%s2] sm:$0x1]
    %v82 = vperm.slane %v80, 0
    %v86 = vunpack.c.l.b16 %v74
    %v87 = vunpack.c.l.b16 %v75
    %v88 = vpack.c.b16 %v87, %v86
    %v93 = vunpack.c.l.b16 %v76
    %v94 = vunpack.c.l.b16 %v77
    %v95 = vunpack.c.l.b16 %v78
    %v96 = vunpack.c.l.b16 %v79
    %v97 = vpack.c.b16 %v94, %v93
    %v98 = vpack.c.b16 %v96, %v95
    %vm101 = vcmask 261120
    %v103 = vsel %vm101, %v88, 0
    %105 = vmatpush.bf16.msra.mxu0 0
    %106 = vmatpush.bf16.msra.mxu0 0
    %107 = vmatpush.bf16.msra.mxu0 0
    %108 = vmatpush.bf16.msra.mxu0 0
    %109 = vmatpush.bf16.msra.mxu0 0
    %110 = vmatpush.bf16.msra.mxu0 0
    %111 = vmatpush.bf16.msra.mxu0 %v98
    %112 = vmatpush.bf16.msra.mxu0 %v97
    %113 = vmatmul.bf16.gmra.mxu0 %v103
    %v114 = vpop.f32.mrf.mxu0
    %v115 = vadd.f32 %v82, %v114
    %v116 = vpop.f32.mrf.mxu0
    %v117 = vadd.f32 %v82, %v116
    %118 = vdwg.mxu0
    %v119 = vmul.f32 %v115, 0.5
    %v120 = vmul.f32 %v117, 0.5
    %v121 = vtanh.pop %v119
    %v122 = vtanh.pop %v120
    %v123 = vadd.f32 %v121, 1.0
    %v124 = vadd.f32 %v122, 1.0
    %v125 = vmul.f32 %v123, 0.5
    %v126 = vmul.f32 %v124, 0.5
    %v127 = vpack.c.bf16 %v126, %v125
    %v128 = vld [vmem:[#allocation4] sm:$0xf]
    %v129 = vld [vmem:[#allocation4 + $0x4] sm:$0xf]
    %v130 = vld [vmem:[#allocation4 + $0x8] sm:$0xf]
    %v131 = vld [vmem:[#allocation4 + $0xc] sm:$0xf]
    %v132 = vld [vmem:[#allocation4 + $0x10] sm:$0xf]
    %v133 = vld [vmem:[#allocation4 + $0x14] sm:$0xf]
    %v134 = vld [vmem:[#allocation4 + $0x18] sm:$0xf]
    %v135 = vld [vmem:[#allocation4 + $0x1c] sm:$0xf]
    %v136 = vld [vmem:[#allocation4 + $0x20] sm:$0xf]
    %v137 = vld [vmem:[#allocation4 + $0x24] sm:$0xf]
    %v138 = vld [vmem:[#allocation4 + $0x28] sm:$0xf]
    %v139 = vld [vmem:[#allocation4 + $0x2c] sm:$0xf]
    %v140 = vld [vmem:[#allocation4 + $0x30] sm:$0xf]
    %v141 = vld [vmem:[#allocation4 + $0x34] sm:$0xf]
    %v142 = vld [vmem:[#allocation4 + $0x38] sm:$0xf]
    %v143 = vld [vmem:[#allocation4 + $0x3c] sm:$0xf]
    %v144 = vld [vmem:[%s4] sm:$0x1]
    %v146 = vperm.slane %v144, 0
    %v164 = vunpack.c.l.b16 %v128
    %v165 = vunpack.c.l.b16 %v129
    %v166 = vunpack.c.l.b16 %v130
    %v167 = vunpack.c.l.b16 %v131
    %v168 = vunpack.c.l.b16 %v132
    %v169 = vunpack.c.l.b16 %v133
    %v170 = vunpack.c.l.b16 %v134
    %v171 = vunpack.c.l.b16 %v135
    %v172 = vunpack.c.l.b16 %v136
    %v173 = vunpack.c.l.b16 %v137
    %v174 = vunpack.c.l.b16 %v138
    %v175 = vunpack.c.l.b16 %v139
    %v176 = vunpack.c.l.b16 %v140
    %v177 = vunpack.c.l.b16 %v141
    %v178 = vunpack.c.l.b16 %v142
    %v179 = vunpack.c.l.b16 %v143
    %v180 = vpack.c.b16 %v165, %v164
    %v181 = vpack.c.b16 %v167, %v166
    %v182 = vpack.c.b16 %v169, %v168
    %v183 = vpack.c.b16 %v171, %v170
    %v184 = vpack.c.b16 %v173, %v172
    %v185 = vpack.c.b16 %v175, %v174
    %v186 = vpack.c.b16 %v177, %v176
    %v187 = vpack.c.b16 %v179, %v178
    %196 = vmatpush.bf16.msra.mxu0 %v187
    %197 = vmatpush.bf16.msra.mxu0 %v186
    %198 = vmatpush.bf16.msra.mxu0 %v185
    %199 = vmatpush.bf16.msra.mxu0 %v184
    %200 = vmatpush.bf16.msra.mxu0 %v183
    %201 = vmatpush.bf16.msra.mxu0 %v182
    %202 = vmatpush.bf16.msra.mxu0 %v181
    %203 = vmatpush.bf16.msra.mxu0 %v180
    %204 = vmatmul.bf16.gmra.mxu0 %v127
    %v205 = vpop.f32.mrf.mxu0
    %v206 = vadd.f32 %v146, %v205
    %v207 = vpop.f32.mrf.mxu0
    %v208 = vadd.f32 %v146, %v207
    %209 = vdwg.mxu0
    %v210 = vmul.f32 %v206, 0.5
    %v211 = vmul.f32 %v208, 0.5
    %v212 = vtanh.pop %v210
    %v213 = vtanh.pop %v211
    %v214 = vadd.f32 %v212, 1.0
    %v215 = vadd.f32 %v213, 1.0
    %v216 = vmul.f32 %v214, 0.5
    %v217 = vmul.f32 %v215, 0.5
    %v218 = vpack.c.bf16 %v217, %v216
    %v219 = vld [vmem:[#allocation6] sm:$0xf]
    %v220 = vld [vmem:[#allocation6 + $0x4] sm:$0xf]
    %v221 = vld [vmem:[#allocation6 + $0x8] sm:$0xf]
    %v222 = vld [vmem:[#allocation6 + $0xc] sm:$0xf]
    %v223 = vld [vmem:[#allocation6 + $0x10] sm:$0xf]
    %v224 = vld [vmem:[#allocation6 + $0x14] sm:$0xf]
    %v225 = vld [vmem:[#allocation6 + $0x18] sm:$0xf]
    %v226 = vld [vmem:[#allocation6 + $0x1c] sm:$0xf]
    %v227 = vld [vmem:[#allocation6 + $0x20] sm:$0xf]
    %v228 = vld [vmem:[#allocation6 + $0x24] sm:$0xf]
    %v229 = vld [vmem:[#allocation6 + $0x28] sm:$0xf]
    %v230 = vld [vmem:[#allocation6 + $0x2c] sm:$0xf]
    %v231 = vld [vmem:[#allocation6 + $0x30] sm:$0xf]
    %v232 = vld [vmem:[#allocation6 + $0x34] sm:$0xf]
    %v233 = vld [vmem:[#allocation6 + $0x38] sm:$0xf]
    %v234 = vld [vmem:[#allocation6 + $0x3c] sm:$0xf]
    %v235 = vld [vmem:[%s6] sm:$0x1]
    %v237 = vperm.slane %v235, 0
    %v255 = vunpack.c.l.b16 %v219
    %v256 = vunpack.c.l.b16 %v220
    %v257 = vunpack.c.l.b16 %v221
    %v258 = vunpack.c.l.b16 %v222
    %v259 = vunpack.c.l.b16 %v223
    %v260 = vunpack.c.l.b16 %v224
    %v261 = vunpack.c.l.b16 %v225
    %v262 = vunpack.c.l.b16 %v226
    %v263 = vunpack.c.l.b16 %v227
    %v264 = vunpack.c.l.b16 %v228
    %v265 = vunpack.c.l.b16 %v229
    %v266 = vunpack.c.l.b16 %v230
    %v267 = vunpack.c.l.b16 %v231
    %v268 = vunpack.c.l.b16 %v232
    %v269 = vunpack.c.l.b16 %v233
    %v270 = vunpack.c.l.b16 %v234
    %v271 = vpack.c.b16 %v256, %v255
    %v272 = vpack.c.b16 %v258, %v257
    %v273 = vpack.c.b16 %v260, %v259
    %v274 = vpack.c.b16 %v262, %v261
    %v275 = vpack.c.b16 %v264, %v263
    %v276 = vpack.c.b16 %v266, %v265
    %v277 = vpack.c.b16 %v268, %v267
    %v278 = vpack.c.b16 %v270, %v269
    %287 = vmatpush.bf16.msra.mxu0 %v278
    %288 = vmatpush.bf16.msra.mxu0 %v277
    %289 = vmatpush.bf16.msra.mxu0 %v276
    %290 = vmatpush.bf16.msra.mxu0 %v275
    %291 = vmatpush.bf16.msra.mxu0 %v274
    %292 = vmatpush.bf16.msra.mxu0 %v273
    %293 = vmatpush.bf16.msra.mxu0 %v272
    %294 = vmatpush.bf16.msra.mxu0 %v271
    %295 = vmatmul.bf16.gmra.mxu0 %v218
    %v296 = vpop.f32.mrf.mxu0
    %v297 = vadd.f32 %v237, %v296
    %v298 = vpop.f32.mrf.mxu0
    %v299 = vadd.f32 %v237, %v298
    %300 = vdwg.mxu0
    %v301 = vmul.f32 %v297, 0.5
    %v302 = vmul.f32 %v299, 0.5
    %v303 = vtanh.pop %v301
    %v304 = vtanh.pop %v302
    %v305 = vadd.f32 %v303, 1.0
    %v306 = vadd.f32 %v304, 1.0
    %v307 = vmul.f32 %v305, 0.5
    %v308 = vmul.f32 %v306, 0.5
    %vm309 = vcmask 7168
    %310 = vst.msk [vmem:[#allocation7] sm:$0xff] %vm309, %v307
    %311 = vst.msk [vmem:[#allocation7 + $0x8] sm:$0xff] %vm309, %v308
    // Predicated region
    $region42: #{neural_net_forward.1} parent=1 // pred_check
      _
    $region43: #{neural_net_forward.1} parent=1 // pred_check_branch
      %313 = sbr.rel (0) target = $region45
    $region44: #{neural_net_forward.1} parent=1 // pred_region
      // Predicated region
      $region46: #{neural_net_forward.1} parent=44 // pred_check
        _
      $region47: #{neural_net_forward.1} parent=44 // pred_check_branch
        %315 = sbr.rel (0) target = $region49
      $region48: #{neural_net_forward.1} parent=44 // pred_region
        // Predicated region
        $region50: #{neural_net_forward.1} parent=48 // pred_check
          _
        $region51: #{neural_net_forward.1} parent=48 // pred_check_branch
          %317 = sbr.rel (0) target = $region53
        $region52: #{neural_net_forward.1} parent=48 // pred_region
          // Predicated region
          $region65: #{neural_net_forward.1} parent=52 // pred_check
            _
          $region66: #{neural_net_forward.1} parent=52 // pred_check_branch
            %333 = sbr.rel (0) target = $region68
          $region67: #{neural_net_forward.1} parent=52 // pred_region
            loop: start=0, step=1, limit=1
            $region69: #{neural_net_forward.1} parent=67 // loop_pre_header
              _
            $region70: #{neural_net_forward.1} parent=67 // loop_header
              %s335 = sphi 0, %s339
              %p336 = scmp.ge.s32.totalorder %s335, 1
              %s340 = sphi [#allocation7], [#allocation7]
              %s341 = sphi %s7, %s7
            $region71: #{neural_net_forward.1} parent=67 // loop_header_branch
              %338 = sbr.rel (%p336) target = $region75
            $region72: #{neural_net_forward.1} parent=67 // loop_body
              %v342 = vld [vmem:[%s340] sm:$0xff]
              %343 = vst [vmem:[%s341] sm:$0xff] %v342
            $region73: #{neural_net_forward.1} parent=67 // loop_footer
              %s339 = sadd.s32 1, %s335
            $region74: #{neural_net_forward.1} parent=67 // loop_footer_branch
              %334 = sbr.rel target = $region70
            $region75: #{neural_net_forward.1} parent=67 // loop_exit
              _
          $region68: #{neural_net_forward.1} parent=52 // pred_fallthru
            _
          // Predicated region
          $region76: #{neural_net_forward.1} parent=52 // pred_check
            _
          $region77: #{neural_net_forward.1} parent=52 // pred_check_branch
            %345 = sbr.rel target = $region79
          $region78: #{neural_net_forward.1} parent=52 // pred_region
            _
          $region79: #{neural_net_forward.1} parent=52 // pred_fallthru
            _
        $region53: #{neural_net_forward.1} parent=48 // pred_fallthru
          _
        // Predicated region
        $region54: #{neural_net_forward.1} parent=48 // pred_check
          _
        $region55: #{neural_net_forward.1} parent=48 // pred_check_branch
          %319 = sbr.rel target = $region57
        $region56: #{neural_net_forward.1} parent=48 // pred_region
          %s321 = ssub.s32 256, 1
          loop: start=0, step=1, limit=1
          $region58: #{neural_net_forward.1} parent=56 // loop_pre_header
            _
          $region59: #{neural_net_forward.1} parent=56 // loop_header
            %s323 = sphi 0, %s327
            %p324 = scmp.ge.s32.totalorder %s323, 1
            %s328 = sphi [#allocation7], [#allocation7]
            %s329 = sphi %s7, %s7
          $region60: #{neural_net_forward.1} parent=56 // loop_header_branch
            %326 = sbr.rel (%p324) target = $region64
          $region61: #{neural_net_forward.1} parent=56 // loop_body
            %v330 = vld [vmem:[%s328] sm:%s321]
            %331 = vst [vmem:[%s329] sm:%s321] %v330
          $region62: #{neural_net_forward.1} parent=56 // loop_footer
            %s327 = sadd.s32 1, %s323
          $region63: #{neural_net_forward.1} parent=56 // loop_footer_branch
            %322 = sbr.rel target = $region59
          $region64: #{neural_net_forward.1} parent=56 // loop_exit
            _
        $region57: #{neural_net_forward.1} parent=48 // pred_fallthru
          _
      $region49: #{neural_net_forward.1} parent=44 // pred_fallthru
        _
      %346 = vnop
    $region45: #{neural_net_forward.1} parent=1 // pred_fallthru
      _
    // Predicated region
    $region80: #{neural_net_forward.1} parent=1 // pred_check
      _
    $region81: #{neural_net_forward.1} parent=1 // pred_check_branch
      %348 = sbr.rel (0) target = $region83
    $region82: #{neural_net_forward.1} parent=1 // pred_region
      _
    $region83: #{neural_net_forward.1} parent=1 // pred_fallthru
      _
    %349 = vsyncpa [#allocation3], 1
    %350 = vsyncpa [#allocation5], 1

</llo_original>
